<compile_context>
chip_gen: v7x
topology: tpu7x:2x2x1
jax: 0.10.0
libtpu: 0.0.40
codegen_flags: <defaults>
</compile_context>

<pallas_src>
import numpy as np
import jax
import jax.numpy as jnp
from jax.experimental import pallas as pl
from jax.experimental.pallas import tpu as pltpu

HIDDEN = 32      # hidden_features (small for the example)
N_FREQ = 2       # n_freq
OUT = 2          # out_features
D_COORD = 2      # self.B = nn.Linear(2, 2) hardcodes 2-D coordinates
TILE_N = 8192    # default batch columns per grid step (multiple of 128)
SLAB_LANES = 128

# f32 parameter-slab column layout (each parameter is one length-32 column,
# zero-padded; 2-row quantities live in rows 0:2 of their column).
C_WPFF0, C_WPFF1 = 0, 1      # (Wp_ff * mask)[:, 0] / [:, 1]
C_WPX0, C_WPX1 = 2, 3        # Wp_x[:, 0] / [:, 1]
C_BP, C_B1, C_B2 = 4, 5, 6   # hidden biases
C_W3R0, C_W3R1 = 7, 8        # W3[0, :] / W3[1, :]
C_BW0, C_BW1 = 9, 10         # Bw[:, 0] / Bw[:, 1]   (rows 0:2)
C_B3 = 11                    # b3                    (rows 0:2)


def _softplus(x):
    # matches torch.nn.Softplus(beta=1, threshold=20)
    return jnp.where(x > 20.0, x, jnp.log1p(jnp.exp(jnp.minimum(x, 20.0))))


def mlp_kernel(x_ref, sf_ref, wb_ref, o_ref):
    # Feature-major: x (2, T), activations (H, T), output (OUT, T).
    x = x_ref[...]
    x0, x1 = x[0:1, :], x[1:2, :]
    sf = sf_ref[...]                                   # (32, 128) f32 slab

    # InputMapping: y = Bw @ x ; K=2 -> VPU broadcast-MACs (MXU would be <2% used)
    bw0 = sf[0:2, C_BW0:C_BW0 + 1]                     # (2, 1) = Bw[:, 0]
    bw1 = sf[0:2, C_BW1:C_BW1 + 1]                     # (2, 1) = Bw[:, 1]
    ff = jnp.sin(bw0 * x0 + bw1 * x1)                  # (2, T); mask folded into Wp_ff

    # Projection of concat([ff, x]) to hidden, as K=4 broadcast-MACs.
    h = (sf[:, C_WPFF0:C_WPFF0 + 1] * ff[0:1, :]
         + sf[:, C_WPFF1:C_WPFF1 + 1] * ff[1:2, :]
         + sf[:, C_WPX0:C_WPX0 + 1] * x0
         + sf[:, C_WPX1:C_WPX1 + 1] * x1
         + sf[:, C_BP:C_BP + 1])                       # (H, T) f32

    # Hidden layers: f32 tanh, bf16 MXU operands, f32 accumulate.
    w1 = wb_ref[0:HIDDEN, :]                           # (32, 32) bf16
    w2 = wb_ref[HIDDEN:2 * HIDDEN, :]                  # (32, 32) bf16
    h = jnp.dot(w1, jnp.tanh(h).astype(jnp.bfloat16),
                preferred_element_type=jnp.float32) + sf[:, C_B1:C_B1 + 1]
    h = jnp.dot(w2, jnp.tanh(h).astype(jnp.bfloat16),
                preferred_element_type=jnp.float32) + sf[:, C_B2:C_B2 + 1]

    # Softplus -> Linear(H, 2) kept OFF the MXU: VPU multiply + cross-sublane
    # (XLU) reduce per output row (only 2 rows, MXU would stream (32,T) anyway).
    s = _softplus(h)                                   # (H, T) f32
    o0 = jnp.sum(sf[:, C_W3R0:C_W3R0 + 1] * s, axis=0, keepdims=True)   # (1, T)
    o1 = jnp.sum(sf[:, C_W3R1:C_W3R1 + 1] * s, axis=0, keepdims=True)   # (1, T)
    o_ref[0:1, :] = (o0 + sf[0:1, C_B3:C_B3 + 1]).astype(o_ref.dtype)
    o_ref[1:2, :] = (o1 + sf[1:2, C_B3:C_B3 + 1]).astype(o_ref.dtype)


def init_params(key):
    ks = jax.random.split(key, 12)

    def lin_w(k, fan_out, fan_in):
        bound = 1.0 / np.sqrt(fan_in)
        return jax.random.uniform(k, (fan_out, fan_in), jnp.float32, -bound, bound)

    def lin_b(k, fan_out, fan_in):
        bound = 1.0 / np.sqrt(fan_in)
        return jax.random.uniform(k, (1, fan_out), jnp.float32, -bound, bound)

    params = dict(
        Bw=lin_w(ks[0], N_FREQ, D_COORD),                  # Linear(2,2,bias=False)
        mask=jnp.ones((1, N_FREQ), jnp.float32),           # fixed mask
        Wp_ff=lin_w(ks[1], HIDDEN, N_FREQ),                # projection (fourier part)
        Wp_x=lin_w(ks[2], HIDDEN, D_COORD),                # projection (coord part)
        bp=lin_b(ks[3], HIDDEN, N_FREQ + D_COORD),
        W1=lin_w(ks[4], HIDDEN, HIDDEN), b1=lin_b(ks[5], HIDDEN, HIDDEN),
        W2=lin_w(ks[6], HIDDEN, HIDDEN), b2=lin_b(ks[7], HIDDEN, HIDDEN),
        W3=lin_w(ks[8], OUT, HIDDEN),    b3=lin_b(ks[9], OUT, HIDDEN),
    )
    return params


def _pack_params(params):
    """Pack the 11 tiny tensors into one f32 slab + one bf16 slab."""
    def col32(v):
        v = jnp.asarray(v, jnp.float32).reshape(-1)
        return jnp.pad(v, (0, HIDDEN - v.shape[0]))

    # Fold the (fixed, elementwise) fourier mask into the projection weights.
    wpff_eff = params["Wp_ff"] * params["mask"]            # (H, 2)
    cols = [
        wpff_eff[:, 0], wpff_eff[:, 1],
        params["Wp_x"][:, 0], params["Wp_x"][:, 1],
        params["bp"][0, :], params["b1"][0, :], params["b2"][0, :],
        params["W3"][0, :], params["W3"][1, :],
        params["Bw"][:, 0], params["Bw"][:, 1],
        params["b3"][0, :],
    ]
    slab = jnp.stack([col32(c) for c in cols], axis=1)     # (32, 12)
    slab = jnp.pad(slab, ((0, 0), (0, SLAB_LANES - slab.shape[1])))  # (32, 128)

    wb = jnp.concatenate([params["W1"], params["W2"]], axis=0).astype(jnp.bfloat16)
    return slab, wb                                        # (32,128) f32, (64,32) bf16


def model_forward(x, params, tile_n=TILE_N):
    N = x.shape[0]
    # v7x: 2 TCs split the "parallel" grid axis -> keep >= 2 grid steps when
    # the batch allows it; never go below one 128-lane tile.
    if N < 2 * tile_n:
        tile_n = max(128, -(-((N + 1) // 2) // 128) * 128)
    n_pad = -(-N // tile_n) * tile_n

    # One-time transpose/pad in the wrapper (trace-time layout plumbing).
    xt = jnp.pad(x.T, ((0, 0), (0, n_pad - N)))            # (2, n_pad)
    slab, wb = _pack_params(params)

    grid = (n_pad // tile_n,)
    # per-column: ~4.5 Kflop (2 MXU 32x32 layers + VPU input/output maps),
    # ~130 transcendentals (2 sin + 64 tanh + 64 exp/log1p), 16 B of x/out I/O.
    cost = pl.CostEstimate(flops=int(4552 * n_pad),
                           transcendentals=int(130 * n_pad),
                           bytes_accessed=int(16 * n_pad) + 20480)

    out_t = pl.pallas_call(
        mlp_kernel,
        out_shape=jax.ShapeDtypeStruct((OUT, n_pad), jnp.float32),
        grid=grid,
        in_specs=[
            pl.BlockSpec((D_COORD, tile_n), lambda i: (0, i)),   # x tile
            pl.BlockSpec(slab.shape, lambda i: (0, 0)),          # f32 param slab (VMEM-resident)
            pl.BlockSpec(wb.shape, lambda i: (0, 0)),            # bf16 W1/W2 slab (VMEM-resident)
        ],
        out_specs=pl.BlockSpec((OUT, tile_n), lambda i: (0, i)),
        compiler_params=pltpu.CompilerParams(
            dimension_semantics=("parallel",)),
        cost_estimate=cost,
    )(xt, slab, wb)
    return out_t[:, :N].T


def model_forward_ref(x, p):
    # Pure-f32 reference of the forward pass.
    y = x @ p["Bw"].T
    ff = jnp.sin(y) * p["mask"]
    h = ff @ p["Wp_ff"].T + x @ p["Wp_x"].T + p["bp"]
    h = jnp.tanh(h) @ p["W1"].T + p["b1"]
    h = jnp.tanh(h) @ p["W2"].T + p["b2"]
    return _softplus(h) @ p["W3"].T + p["b3"]


if __name__ == "__main__":
    key = jax.random.PRNGKey(0)
    kx, kp = jax.random.split(key)
    N = 8
    x = jax.random.normal(kx, (N, D_COORD), jnp.float32)
    params = init_params(kp)

    out = jax.block_until_ready(model_forward(x, params))
    ref = model_forward_ref(x, params)
    # Tolerance loosened vs. the f32 reference: the two hidden layers use
    # bf16 MXU operands (f32 accumulate), ~0.4% per-operand rounding.
    np.testing.assert_allclose(np.asarray(out), np.asarray(ref), rtol=5e-2, atol=5e-2)
    assert out.shape == (N, OUT)
    print("KERNEL_OK")
</pallas_src>

<mosaic_0001>
module attributes {stable_mosaic.version = 11 : i64} {
  func.func @mlp_kernel(%arg0: i32, %arg1: memref<2x128xf32, #tpu.memory_space<vmem>>, %arg2: memref<32x128xf32, #tpu.memory_space<vmem>>, %arg3: memref<64x32xbf16, #tpu.memory_space<vmem>>, %arg4: memref<2x128xf32, #tpu.memory_space<vmem>>) attributes {dimension_semantics = [#tpu.dimension_semantics<parallel>], iteration_bounds = array<i64: 1>, scalar_prefetch = 0 : i64, scratch_operands = 0 : i64, tpu.core_type = #tpu.core_type<tc>, window_params = [{transform_indices = @transform_0, window_bounds = array<i64: 2, 128>}, {pipeline_mode = #tpu.pipeline_mode<synchronous>, transform_indices = @transform_1, window_bounds = array<i64: 32, 128>}, {pipeline_mode = #tpu.pipeline_mode<synchronous>, transform_indices = @transform_2, window_bounds = array<i64: 64, 32>}, {transform_indices = @transform_3, window_bounds = array<i64: 2, 128>}]} {
    %c0 = arith.constant 0 : index
    %c0_0 = arith.constant 0 : index
    %0 = vector.load %arg1[%c0, %c0_0] : memref<2x128xf32, #tpu.memory_space<vmem>>, vector<2x128xf32>
    %1 = vector.extract_strided_slice %0 {offsets = [0, 0], sizes = [1, 128], strides = [1, 1]} : vector<2x128xf32> to vector<1x128xf32>
    %2 = vector.extract_strided_slice %0 {offsets = [1, 0], sizes = [1, 128], strides = [1, 1]} : vector<2x128xf32> to vector<1x128xf32>
    %c0_1 = arith.constant 0 : index
    %c0_2 = arith.constant 0 : index
    %3 = vector.load %arg2[%c0_1, %c0_2] : memref<32x128xf32, #tpu.memory_space<vmem>>, vector<32x128xf32>
    %4 = vector.extract_strided_slice %3 {offsets = [0, 9], sizes = [2, 1], strides = [1, 1]} : vector<32x128xf32> to vector<2x1xf32>
    %5 = vector.extract_strided_slice %3 {offsets = [0, 10], sizes = [2, 1], strides = [1, 1]} : vector<32x128xf32> to vector<2x1xf32>
    %6 = vector.broadcast %4 : vector<2x1xf32> to vector<2x128xf32>
    %7 = vector.broadcast %1 : vector<1x128xf32> to vector<2x128xf32>
    %8 = arith.mulf %6, %7 : vector<2x128xf32>
    %9 = vector.broadcast %5 : vector<2x1xf32> to vector<2x128xf32>
    %10 = vector.broadcast %2 : vector<1x128xf32> to vector<2x128xf32>
    %11 = arith.mulf %9, %10 : vector<2x128xf32>
    %12 = arith.addf %8, %11 : vector<2x128xf32>
    %13 = math.sin %12 : vector<2x128xf32>
    %14 = vector.extract_strided_slice %3 {offsets = [0, 0], sizes = [32, 1], strides = [1, 1]} : vector<32x128xf32> to vector<32x1xf32>
    %15 = vector.extract_strided_slice %13 {offsets = [0, 0], sizes = [1, 128], strides = [1, 1]} : vector<2x128xf32> to vector<1x128xf32>
    %16 = vector.broadcast %14 : vector<32x1xf32> to vector<32x128xf32>
    %17 = vector.broadcast %15 : vector<1x128xf32> to vector<32x128xf32>
    %18 = arith.mulf %16, %17 : vector<32x128xf32>
    %19 = vector.extract_strided_slice %3 {offsets = [0, 1], sizes = [32, 1], strides = [1, 1]} : vector<32x128xf32> to vector<32x1xf32>
    %20 = vector.extract_strided_slice %13 {offsets = [1, 0], sizes = [1, 128], strides = [1, 1]} : vector<2x128xf32> to vector<1x128xf32>
    %21 = vector.broadcast %19 : vector<32x1xf32> to vector<32x128xf32>
    %22 = vector.broadcast %20 : vector<1x128xf32> to vector<32x128xf32>
    %23 = arith.mulf %21, %22 : vector<32x128xf32>
    %24 = arith.addf %18, %23 : vector<32x128xf32>
    %25 = vector.extract_strided_slice %3 {offsets = [0, 2], sizes = [32, 1], strides = [1, 1]} : vector<32x128xf32> to vector<32x1xf32>
    %26 = vector.broadcast %25 : vector<32x1xf32> to vector<32x128xf32>
    %27 = vector.broadcast %1 : vector<1x128xf32> to vector<32x128xf32>
    %28 = arith.mulf %26, %27 : vector<32x128xf32>
    %29 = arith.addf %24, %28 : vector<32x128xf32>
    %30 = vector.extract_strided_slice %3 {offsets = [0, 3], sizes = [32, 1], strides = [1, 1]} : vector<32x128xf32> to vector<32x1xf32>
    %31 = vector.broadcast %30 : vector<32x1xf32> to vector<32x128xf32>
    %32 = vector.broadcast %2 : vector<1x128xf32> to vector<32x128xf32>
    %33 = arith.mulf %31, %32 : vector<32x128xf32>
    %34 = arith.addf %29, %33 : vector<32x128xf32>
    %35 = vector.extract_strided_slice %3 {offsets = [0, 4], sizes = [32, 1], strides = [1, 1]} : vector<32x128xf32> to vector<32x1xf32>
    %36 = vector.broadcast %35 : vector<32x1xf32> to vector<32x128xf32>
    %37 = arith.addf %34, %36 : vector<32x128xf32>
    %c0_3 = arith.constant 0 : index
    %c0_4 = arith.constant 0 : index
    %38 = vector.load %arg3[%c0_3, %c0_4] : memref<64x32xbf16, #tpu.memory_space<vmem>>, vector<32x32xbf16>
    %c32 = arith.constant 32 : index
    %c0_5 = arith.constant 0 : index
    %39 = vector.load %arg3[%c32, %c0_5] : memref<64x32xbf16, #tpu.memory_space<vmem>>, vector<32x32xbf16>
    %40 = math.tanh %37 : vector<32x128xf32>
    %41 = arith.truncf %40 : vector<32x128xf32> to vector<32x128xbf16>
    %cst = arith.constant dense<0.000000e+00> : vector<32x128xf32>
    %42 = tpu.matmul %38, %41, %cst {dimension_numbers = #tpu.dot_dimension_numbers<[1], [0], [0], [1], [0, 0, 1, 1], [], []>} : vector<32x32xbf16>, vector<32x128xbf16>, vector<32x128xf32> -> vector<32x128xf32>
    %43 = vector.extract_strided_slice %3 {offsets = [0, 5], sizes = [32, 1], strides = [1, 1]} : vector<32x128xf32> to vector<32x1xf32>
    %44 = vector.broadcast %43 : vector<32x1xf32> to vector<32x128xf32>
    %45 = arith.addf %42, %44 : vector<32x128xf32>
    %46 = math.tanh %45 : vector<32x128xf32>
    %47 = arith.truncf %46 : vector<32x128xf32> to vector<32x128xbf16>
    %cst_6 = arith.constant dense<0.000000e+00> : vector<32x128xf32>
    %48 = tpu.matmul %39, %47, %cst_6 {dimension_numbers = #tpu.dot_dimension_numbers<[1], [0], [0], [1], [0, 0, 1, 1], [], []>} : vector<32x32xbf16>, vector<32x128xbf16>, vector<32x128xf32> -> vector<32x128xf32>
    %49 = vector.extract_strided_slice %3 {offsets = [0, 6], sizes = [32, 1], strides = [1, 1]} : vector<32x128xf32> to vector<32x1xf32>
    %50 = vector.broadcast %49 : vector<32x1xf32> to vector<32x128xf32>
    %51 = arith.addf %48, %50 : vector<32x128xf32>
    %cst_7 = arith.constant 2.000000e+01 : f32
    %52 = vector.broadcast %cst_7 : f32 to vector<32x128xf32>
    %53 = arith.cmpf ogt, %51, %52 : vector<32x128xf32>
    %cst_8 = arith.constant 2.000000e+01 : f32
    %54 = vector.broadcast %cst_8 : f32 to vector<32x128xf32>
    %55 = arith.minimumf %51, %54 : vector<32x128xf32>
    %56 = math.exp %55 : vector<32x128xf32>
    %57 = math.log1p %56 : vector<32x128xf32>
    %58 = arith.select %53, %51, %57 : vector<32x128xi1>, vector<32x128xf32>
    %59 = vector.extract_strided_slice %3 {offsets = [0, 7], sizes = [32, 1], strides = [1, 1]} : vector<32x128xf32> to vector<32x1xf32>
    %60 = vector.broadcast %59 : vector<32x1xf32> to vector<32x128xf32>
    %61 = arith.mulf %60, %58 : vector<32x128xf32>
    %cst_9 = arith.constant dense<0.000000e+00> : vector<128xf32>
    %62 = vector.multi_reduction <add>, %61, %cst_9 [0] : vector<32x128xf32> to vector<128xf32>
    %63 = vector.shape_cast %62 : vector<128xf32> to vector<1x128xf32>
    %64 = vector.extract_strided_slice %3 {offsets = [0, 8], sizes = [32, 1], strides = [1, 1]} : vector<32x128xf32> to vector<32x1xf32>
    %65 = vector.broadcast %64 : vector<32x1xf32> to vector<32x128xf32>
    %66 = arith.mulf %65, %58 : vector<32x128xf32>
    %cst_10 = arith.constant dense<0.000000e+00> : vector<128xf32>
    %67 = vector.multi_reduction <add>, %66, %cst_10 [0] : vector<32x128xf32> to vector<128xf32>
    %68 = vector.shape_cast %67 : vector<128xf32> to vector<1x128xf32>
    %69 = vector.extract_strided_slice %3 {offsets = [0, 11], sizes = [1, 1], strides = [1, 1]} : vector<32x128xf32> to vector<1x1xf32>
    %70 = vector.broadcast %69 : vector<1x1xf32> to vector<1x128xf32>
    %71 = arith.addf %63, %70 : vector<1x128xf32>
    %c0_11 = arith.constant 0 : index
    %c0_12 = arith.constant 0 : index
    %72 = vector.load %arg4[%c0_11, %c0_12] : memref<2x128xf32, #tpu.memory_space<vmem>>, vector<1x128xf32>
    tpu.vector_store %arg4[%c0_11, %c0_12], %71 {strides = array<i32>} : memref<2x128xf32, #tpu.memory_space<vmem>>, vector<1x128xf32>,
    %73 = vector.extract_strided_slice %3 {offsets = [1, 11], sizes = [1, 1], strides = [1, 1]} : vector<32x128xf32> to vector<1x1xf32>
    %74 = vector.broadcast %73 : vector<1x1xf32> to vector<1x128xf32>
    %75 = arith.addf %68, %74 : vector<1x128xf32>
    %c1 = arith.constant 1 : index
    %c0_13 = arith.constant 0 : index
    %76 = vector.load %arg4[%c1, %c0_13] : memref<2x128xf32, #tpu.memory_space<vmem>>, vector<1x128xf32>
    tpu.vector_store %arg4[%c1, %c0_13], %75 {strides = array<i32>} : memref<2x128xf32, #tpu.memory_space<vmem>>, vector<1x128xf32>,
    return
  }
  func.func @transform_0(%arg0: i32) -> (i32, i32) {
    %c0_i32 = arith.constant 0 : i32
    %c0_i32_0 = arith.constant 0 : i32
    return %c0_i32, %arg0 : i32, i32
  }
  func.func @transform_1(%arg0: i32) -> (i32, i32) {
    %c0_i32 = arith.constant 0 : i32
    %c0_i32_0 = arith.constant 0 : i32
    %c0_i32_1 = arith.constant 0 : i32
    return %c0_i32, %c0_i32_0 : i32, i32
  }
  func.func @transform_2(%arg0: i32) -> (i32, i32) {
    %c0_i32 = arith.constant 0 : i32
    %c0_i32_0 = arith.constant 0 : i32
    %c0_i32_1 = arith.constant 0 : i32
    return %c0_i32, %c0_i32_0 : i32, i32
  }
  func.func @transform_3(%arg0: i32) -> (i32, i32) {
    %c0_i32 = arith.constant 0 : i32
    %c0_i32_0 = arith.constant 0 : i32
    return %c0_i32, %arg0 : i32, i32
  }
}

</mosaic_0001>

<llo_original>
// kernel: tpu_custom_call.1
$region0: #{tpu_custom_call.1}
  #allocation0 [shape = 'u32[]', space=smem, size = 0x4, offset = 0x4, fixed_abs, tag = 'smem constant byte address 0x4 - core index']
  #allocation1 [shape = 'u32[144,128]{1,0:T(1,128)}', space=vmem, size = 0x12000, scoped, tag = 'internal scratch']
  %s0 = inlined_call_operand.vmem [shape: f32[2,128], index: 0, kind: input, shape index: {}]
  %s1 = inlined_call_operand.vmem [shape: f32[32,128], index: 1, kind: input, shape index: {}]
  %s2 = inlined_call_operand.vmem [shape: bf16[64,32], index: 2, kind: input, shape index: {}]
  %s3 = inlined_call_operand.hbm [shape: f32[2,128], index: 3, kind: output, shape index: {}]
  %s4 = sld [smem:[#allocation0]]
  $region22: #{tpu_custom_call.1} parent=0
    _
  %s6 = ssub.s32 1, %s4
  %s7 = scalar_select 0, %s6, %s4
  $region1: #{tpu_custom_call.1} parent=0
    #allocation2 [shape = 'u8[1024]{0}', space=vmem, size = 0x400, scoped, tag = 'output window, operand 0, single buffered']
    #allocation3 [shape = 's32[1]{0}', space=sflag, size = 0x4, scoped, tag = 'scoped memory for tpu_custom_call.1']
    %8 = vsyncpa [#allocation3], 0
    // Predicated region
    $region2: #{tpu_custom_call.1} parent=1 // pred_check
      _
    $region3: #{tpu_custom_call.1} parent=1 // pred_check_branch
      %10 = sbr.rel (0) target = $region5
    $region4: #{tpu_custom_call.1} parent=1 // pred_region
      _
    $region5: #{tpu_custom_call.1} parent=1 // pred_fallthru
      _
    // Predicated region
    $region6: #{tpu_custom_call.1} parent=1 // pred_check
      _
    $region7: #{tpu_custom_call.1} parent=1 // pred_check_branch
      %12 = sbr.rel (0) target = $region9
    $region8: #{tpu_custom_call.1} parent=1 // pred_region
      _
    $region9: #{tpu_custom_call.1} parent=1 // pred_fallthru
      _
    // Predicated region
    $region10: #{tpu_custom_call.1} parent=1 // pred_check
      _
    $region11: #{tpu_custom_call.1} parent=1 // pred_check_branch
      %14 = sbr.rel (0) target = $region13
    $region12: #{tpu_custom_call.1} parent=1 // pred_region
      _
    $region13: #{tpu_custom_call.1} parent=1 // pred_fallthru
      _
    %v16 = vld [vmem:[%s0] sm:$0x3]
    %v17 = vld [vmem:[%s1] sm:$0xff]
    %v18 = vld [vmem:[%s1 + $0x8] sm:$0xff]
    %v19 = vld [vmem:[%s1 + $0x10] sm:$0xff]
    %v20 = vld [vmem:[%s1 + $0x18] sm:$0xff]
    %22 = vset.pattern.permute.xlu0 9
    %23 = vperm.xlu0 %22, %v17
    %v24 = vpop.permute.xlu0 %23
    %v26 = vlaneseq
    %v27 = vshrl.u32 %v26, 7
    %v28 = vsub.s32 0, %v27
    %v29 = vrot.slane %v16, %v28
    %v30 = vmul.f32 %v24, %v29
    %31 = vset.pattern.permute.xlu0 10
    %32 = vperm.xlu0 %31, %v17
    %v33 = vpop.permute.xlu0 %32
    %v35 = vlaneseq
    %v36 = vshrl.u32 %v35, 7
    %v37 = vsub.s32 1, %v36
    %v38 = vrot.slane %v16, %v37
    %v39 = vmul.f32 %v33, %v38
    %v40 = vadd.f32 %v30, %v39
    %v41 = vand.u32 2147483647, %v40
    %vm42 = vcmp.le.f32.partialorder %v41, 0.7853982
    %vm43 = vcmp.lt.s32.totalorder %v40, 0
    %v44 = vand.u32 %v40, 2139095040
    %v45 = vshrl.u32 %v44, 23
    %v46 = vsub.s32 %v45, 127
    %v47 = vand.u32 2147483647, %v40
    %v48 = vand.u32 %v47, 8388607
    %v49 = vor.u32 %v48, 8388608
    %v50 = vsub.s32 0, %v49
    %v51 = vadd.s32 %v46, 1
    %vm52 = vcmp.gt.s32.totalorder %v51, 0
    %v53 = vsel %vm52, %v51, 0
    %v54 = vshrl.u32 %v53, 5
    %v55 = vand.u32 %v53, 31
    %v56 = vsub.s32 32, %v55
    %v57 = vshrl.u32 683565275, %v56
    %v58 = vshll.u32 683565275, %v55
    %v59 = vshrl.u32 2475754826, %v56
    %v60 = vor.u32 %v58, %v59
    %v61 = vshll.u32 2475754826, %v55
    %v62 = vshrl.u32 2131351028, %v56
    %v63 = vor.u32 %v61, %v62
    %v64 = vshll.u32 2131351028, %v55
    %v65 = vshrl.u32 2102212464, %v56
    %v66 = vor.u32 %v64, %v65
    %v67 = vshll.u32 2102212464, %v55
    %v68 = vshrl.u32 920167782, %v56
    %v69 = vor.u32 %v67, %v68
    %v70 = vshll.u32 920167782, %v55
    %v71 = vshrl.u32 1326507024, %v56
    %v72 = vor.u32 %v70, %v71
    %vm73 = vcmp.lt.s32.totalorder %v54, 1
    %vm74 = vcmp.lt.s32.totalorder %v54, 2
    %vm75 = vcmp.lt.s32.totalorder %v54, 3
    %vm76 = vcmp.lt.s32.totalorder %v54, 4
    %v77 = vsel %vm73, %v57, %v60
    %v78 = vsel %vm76, %v66, 2102212464
    %v79 = vsel %vm75, %v63, %v78
    %v80 = vsel %vm74, %v77, %v79
    %v81 = vsel %vm73, %v60, %v63
    %v82 = vsel %vm76, %v69, 920167782
    %v83 = vsel %vm75, %v66, %v82
    %v84 = vsel %vm74, %v81, %v83
    %v85 = vsel %vm73, %v63, %v66
    %v86 = vsel %vm76, %v72, 1326507024
    %v87 = vsel %vm75, %v69, %v86
    %v88 = vsel %vm74, %v85, %v87
    %v89 = vshll.u32 %v49, 8
    %v90 = vmul.u32.u64.compose %v89, %v88
    %v91 = vextract.low.u32 %v90
    %v92 = vextract.high.u32 %v90
    %v93 = vmul.u32.u64.compose %v89, %v84
    %v94 = vextract.low.u32 %v93
    %v95 = vextract.high.u32 %v93
    %v96 = vmul.u32 %v89, %v80
    %v97 = vadd.s32 %v92, %v94
    %vm98 = vc.u32 %v92, %v94
    %v99 = vadd.s32 %v95, 1
    %v100 = vsel %vm98, %v99, %v95
    %v101 = vadd.s32 %v96, %v100
    %v102 = vadd.s32 %v101, 536870912
    %v103 = vshrl.u32 %v102, 30
    %v104 = vshll.u32 %v103, 30
    %v105 = vsub.s32 %v101, %v104
    %vm106 = vcmp.lt.s32.totalorder %v105, 0
    %v107 = vsub.s32 0, %v105
    %v108 = vsel %vm106, %v107, %v105
    %v109 = vclz %v108
    %v110 = vsub.s32 %v109, 2
    %vm111 = vcmp.gt.s32.totalorder 0, %v110
    %v112 = vsel %vm111, 0, %v110
    %v113 = vsub.s32 32, %v112
    %v114 = vshll.u32 %v105, %v112
    %v115 = vshrl.u32 %v97, %v113
    %v116 = vor.u32 %v114, %v115
    %v117 = vsub.s32 4294967266, %v112
    %v118 = vadd.s32 %v117, 127
    %v119 = vshll.u32 %v118, 23
    %v120 = vor.u32 4788187, %v119
    %v121 = vand.u32 2147483647, %v120
    %v123 = vcvt.s32.f32 %v116
    %v124 = vmul.f32 %v123, %v121
    %v125 = vxor.u32 %v124, 2147483648
    %v126 = vsel %vm43, %v125, %v124
    %v127 = vsub.s32 4, %v103
    %v128 = vsel %vm43, %v127, %v103
    %v129 = vsel %vm42, %v40, %v126
    %v130 = vsel %vm42, 0, %v128
    %v131 = vcosq.f32.pop %v129
    %v132 = vsinq.f32.pop %v129
    %vm133 = vweird.f32 %v40
    %v134 = vadd.s32 %v130, 3
    %v135 = vand.u32 %v134, 3
    %vm136 = vcmp.lt.s32.totalorder %v135, 2
    %vm137 = vcmp.eq.s32.totalorder %v135, 0
    %v138 = vxor.u32 %v132, 2147483648
    %v139 = vsel %vm137, %v131, %v138
    %vm140 = vcmp.eq.s32.totalorder %v135, 2
    %v141 = vxor.u32 %v131, 2147483648
    %v142 = vsel %vm140, %v141, %v132
    %v143 = vsel %vm136, %v139, %v142
    %v144 = vsel %vm133, nan, %v143
    %145 = vset.pattern.permute.xlu0 0
    %146 = vperm.xlu0 %145, %v17
    %v147 = vpop.permute.xlu0 %146
    %150 = vset.pattern.permute.xlu0 0
    %151 = vperm.xlu0 %150, %v18
    %v152 = vpop.permute.xlu0 %151
    %155 = vset.pattern.permute.xlu0 0
    %156 = vperm.xlu0 %155, %v19
    %v157 = vpop.permute.xlu0 %156
    %160 = vset.pattern.permute.xlu0 0
    %161 = vperm.xlu0 %160, %v20
    %v162 = vpop.permute.xlu0 %161
    %v164 = vlaneseq
    %v165 = vshrl.u32 %v164, 7
    %v166 = vsub.s32 0, %v165
    %v167 = vrot.slane %v144, %v166
    %v168 = vmul.f32 %v147, %v167
    %v169 = vmul.f32 %v152, %v167
    %v170 = vmul.f32 %v157, %v167
    %v171 = vmul.f32 %v162, %v167
    %172 = vset.pattern.permute.xlu0 1
    %173 = vperm.xlu0 %172, %v17
    %v174 = vpop.permute.xlu0 %173
    %176 = vset.pattern.permute.xlu0 1
    %177 = vperm.xlu0 %176, %v18
    %v178 = vpop.permute.xlu0 %177
    %180 = vset.pattern.permute.xlu0 1
    %181 = vperm.xlu0 %180, %v19
    %v182 = vpop.permute.xlu0 %181
    %184 = vset.pattern.permute.xlu0 1
    %185 = vperm.xlu0 %184, %v20
    %v186 = vpop.permute.xlu0 %185
    %v188 = vlaneseq
    %v189 = vshrl.u32 %v188, 7
    %v190 = vsub.s32 1, %v189
    %v191 = vrot.slane %v144, %v190
    %v192 = vmul.f32 %v174, %v191
    %v193 = vmul.f32 %v178, %v191
    %v194 = vmul.f32 %v182, %v191
    %v195 = vmul.f32 %v186, %v191
    %v196 = vadd.f32 %v168, %v192
    %v197 = vadd.f32 %v169, %v193
    %v198 = vadd.f32 %v170, %v194
    %v199 = vadd.f32 %v171, %v195
    %200 = vset.pattern.permute.xlu0 2
    %201 = vperm.xlu0 %200, %v17
    %v202 = vpop.permute.xlu0 %201
    %204 = vset.pattern.permute.xlu0 2
    %205 = vperm.xlu0 %204, %v18
    %v206 = vpop.permute.xlu0 %205
    %208 = vset.pattern.permute.xlu0 2
    %209 = vperm.xlu0 %208, %v19
    %v210 = vpop.permute.xlu0 %209
    %212 = vset.pattern.permute.xlu0 2
    %213 = vperm.xlu0 %212, %v20
    %v214 = vpop.permute.xlu0 %213
    %v216 = vmul.f32 %v202, %v29
    %v217 = vmul.f32 %v206, %v29
    %v218 = vmul.f32 %v210, %v29
    %v219 = vmul.f32 %v214, %v29
    %v220 = vadd.f32 %v196, %v216
    %v221 = vadd.f32 %v197, %v217
    %v222 = vadd.f32 %v198, %v218
    %v223 = vadd.f32 %v199, %v219
    %224 = vset.pattern.permute.xlu0 3
    %225 = vperm.xlu0 %224, %v17
    %v226 = vpop.permute.xlu0 %225
    %228 = vset.pattern.permute.xlu0 3
    %229 = vperm.xlu0 %228, %v18
    %v230 = vpop.permute.xlu0 %229
    %232 = vset.pattern.permute.xlu0 3
    %233 = vperm.xlu0 %232, %v19
    %v234 = vpop.permute.xlu0 %233
    %236 = vset.pattern.permute.xlu0 3
    %237 = vperm.xlu0 %236, %v20
    %v238 = vpop.permute.xlu0 %237
    %v240 = vmul.f32 %v226, %v38
    %v241 = vmul.f32 %v230, %v38
    %v242 = vmul.f32 %v234, %v38
    %v243 = vmul.f32 %v238, %v38
    %v244 = vadd.f32 %v220, %v240
    %v245 = vadd.f32 %v221, %v241
    %v246 = vadd.f32 %v222, %v242
    %v247 = vadd.f32 %v223, %v243
    %248 = vset.pattern.permute.xlu0 4
    %249 = vperm.xlu0 %248, %v17
    %v250 = vpop.permute.xlu0 %249
    %252 = vset.pattern.permute.xlu0 4
    %253 = vperm.xlu0 %252, %v18
    %v254 = vpop.permute.xlu0 %253
    %256 = vset.pattern.permute.xlu0 4
    %257 = vperm.xlu0 %256, %v19
    %v258 = vpop.permute.xlu0 %257
    %260 = vset.pattern.permute.xlu0 4
    %261 = vperm.xlu0 %260, %v20
    %v262 = vpop.permute.xlu0 %261
    %v264 = vadd.f32 %v244, %v250
    %v265 = vadd.f32 %v245, %v254
    %v266 = vadd.f32 %v246, %v258
    %v267 = vadd.f32 %v247, %v262
    %v268 = vld [vmem:[%s2] sm:$0xf]
    %v269 = vld [vmem:[%s2 + $0x4] sm:$0xf]
    %v270 = vld [vmem:[%s2 + $0x8] sm:$0xf]
    %v271 = vld [vmem:[%s2 + $0xc] sm:$0xf]
    %v272 = vld [vmem:[%s2 + $0x10] sm:$0xf]
    %v273 = vld [vmem:[%s2 + $0x14] sm:$0xf]
    %v274 = vld [vmem:[%s2 + $0x18] sm:$0xf]
    %v275 = vld [vmem:[%s2 + $0x1c] sm:$0xf]
    %v276 = vtanh.pop %v264
    %v277 = vtanh.pop %v265
    %v278 = vtanh.pop %v266
    %v279 = vtanh.pop %v267
    %v280 = vpack.c.bf16 %v277, %v276
    %v281 = vpack.c.bf16 %v279, %v278
    %282 = vset.pattern.permute.xlu0 5
    %283 = vperm.xlu0 %282, %v17
    %v284 = vpop.permute.xlu0 %283
    %286 = vset.pattern.permute.xlu0 5
    %287 = vperm.xlu0 %286, %v18
    %v288 = vpop.permute.xlu0 %287
    %290 = vset.pattern.permute.xlu0 5
    %291 = vperm.xlu0 %290, %v19
    %v292 = vpop.permute.xlu0 %291
    %294 = vset.pattern.permute.xlu0 5
    %295 = vperm.xlu0 %294, %v20
    %v296 = vpop.permute.xlu0 %295
    %v302 = vunpack.c.l.b16 %v268
    %v303 = vunpack.c.l.b16 %v269
    %v304 = vunpack.c.l.b16 %v270
    %v305 = vunpack.c.l.b16 %v271
    %v306 = vpack.c.b16 %v303, %v302
    %v307 = vpack.c.b16 %v305, %v304
    %vm308 = vcmask 261120
    %v310 = vsel %vm308, %v306, 0
    %v313 = vsel %vm308, %v307, 0
    %315 = vmatprep.subr.bf16.mxu0 0
    %316 = vmatpush1.bf16.msra.mxu0 %v280
    %317 = vmatprep.subr.bf16.mxu0 0
    %318 = vmatpush1.bf16.msra.mxu0 %v281
    %319 = vmatprep.subr.bf16.mxu0 0
    %320 = vmatpush1.bf16.msra.mxu0 0
    %321 = vmatprep.subr.bf16.mxu0 0
    %322 = vmatpush1.bf16.msra.mxu0 0
    %323 = vmatprep.subr.bf16.mxu0 0
    %324 = vmatpush1.bf16.msra.mxu0 0
    %325 = vmatprep.subr.bf16.mxu0 0
    %326 = vmatpush1.bf16.msra.mxu0 0
    %327 = vmatprep.subr.bf16.mxu0 0
    %328 = vmatpush1.bf16.msra.mxu0 0
    %329 = vmatprep.subr.bf16.mxu0 0
    %330 = vmatpush1.bf16.msra.mxu0 0
    %331 = vmatprep.subr.bf16.mxu0 0
    %332 = vmatpush1.bf16.msra.mxu0 0
    %333 = vmatprep.subr.bf16.mxu0 0
    %334 = vmatpush1.bf16.msra.mxu0 0
    %335 = vmatprep.subr.bf16.mxu0 0
    %336 = vmatpush1.bf16.msra.mxu0 0
    %337 = vmatprep.subr.bf16.mxu0 0
    %338 = vmatpush1.bf16.msra.mxu0 0
    %339 = vmatprep.subr.bf16.mxu0 0
    %340 = vmatpush1.bf16.msra.mxu0 0
    %341 = vmatprep.subr.bf16.mxu0 0
    %342 = vmatpush1.bf16.msra.mxu0 0
    %343 = vmatprep.subr.bf16.mxu0 0
    %344 = vmatpush1.bf16.msra.mxu0 0
    %345 = vmatprep.subr.bf16.mxu0 0
    %346 = vmatpush1.bf16.msra.mxu0 0
    %347 = vmatprep.mubr.bf16.mxu0 0
    %348 = vmatmul.mubr.bf16.gmra.mrb[0].mxu0 %v310
    %v349 = vpop.f32.mrb[0].mxu0
    %v350 = vadd.f32 %v284, %v349
    %v351 = vpop.f32.mrb[0].mxu0
    %v352 = vpop.f32.mrb[0].mxu0
    %v353 = vadd.f32 %v288, %v352
    %v354 = vpop.f32.mrb[0].mxu0
    %355 = vmatprep.mubr.bf16.mxu0 0
    %356 = vmatmul.mubr.bf16.gmra.mrb[0].mxu0 %v313
    %v357 = vpop.f32.mrb[0].mxu0
    %v358 = vadd.f32 %v292, %v357
    %v359 = vpop.f32.mrb[0].mxu0
    %v360 = vpop.f32.mrb[0].mxu0
    %v361 = vadd.f32 %v296, %v360
    %v362 = vpop.f32.mrb[0].mxu0
    %363 = vdwg.mxu0
    %v364 = vtanh.pop %v350
    %v365 = vtanh.pop %v353
    %v366 = vtanh.pop %v358
    %v367 = vtanh.pop %v361
    %v368 = vpack.c.bf16 %v365, %v364
    %v369 = vpack.c.bf16 %v367, %v366
    %370 = vset.pattern.permute.xlu0 6
    %371 = vperm.xlu0 %370, %v17
    %v372 = vpop.permute.xlu0 %371
    %374 = vset.pattern.permute.xlu0 6
    %375 = vperm.xlu0 %374, %v18
    %v376 = vpop.permute.xlu0 %375
    %378 = vset.pattern.permute.xlu0 6
    %379 = vperm.xlu0 %378, %v19
    %v380 = vpop.permute.xlu0 %379
    %382 = vset.pattern.permute.xlu0 6
    %383 = vperm.xlu0 %382, %v20
    %v384 = vpop.permute.xlu0 %383
    %v390 = vunpack.c.l.b16 %v272
    %v391 = vunpack.c.l.b16 %v273
    %v392 = vunpack.c.l.b16 %v274
    %v393 = vunpack.c.l.b16 %v275
    %v394 = vpack.c.b16 %v391, %v390
    %v395 = vpack.c.b16 %v393, %v392
    %v397 = vsel %vm308, %v394, 0
    %v400 = vsel %vm308, %v395, 0
    %402 = vmatprep.subr.bf16.mxu0 0
    %403 = vmatpush1.bf16.msra.mxu0 %v368
    %404 = vmatprep.subr.bf16.mxu0 0
    %405 = vmatpush1.bf16.msra.mxu0 %v369
    %406 = vmatprep.subr.bf16.mxu0 0
    %407 = vmatpush1.bf16.msra.mxu0 0
    %408 = vmatprep.subr.bf16.mxu0 0
    %409 = vmatpush1.bf16.msra.mxu0 0
    %410 = vmatprep.subr.bf16.mxu0 0
    %411 = vmatpush1.bf16.msra.mxu0 0
    %412 = vmatprep.subr.bf16.mxu0 0
    %413 = vmatpush1.bf16.msra.mxu0 0
    %414 = vmatprep.subr.bf16.mxu0 0
    %415 = vmatpush1.bf16.msra.mxu0 0
    %416 = vmatprep.subr.bf16.mxu0 0
    %417 = vmatpush1.bf16.msra.mxu0 0
    %418 = vmatprep.subr.bf16.mxu0 0
    %419 = vmatpush1.bf16.msra.mxu0 0
    %420 = vmatprep.subr.bf16.mxu0 0
    %421 = vmatpush1.bf16.msra.mxu0 0
    %422 = vmatprep.subr.bf16.mxu0 0
    %423 = vmatpush1.bf16.msra.mxu0 0
    %424 = vmatprep.subr.bf16.mxu0 0
    %425 = vmatpush1.bf16.msra.mxu0 0
    %426 = vmatprep.subr.bf16.mxu0 0
    %427 = vmatpush1.bf16.msra.mxu0 0
    %428 = vmatprep.subr.bf16.mxu0 0
    %429 = vmatpush1.bf16.msra.mxu0 0
    %430 = vmatprep.subr.bf16.mxu0 0
    %431 = vmatpush1.bf16.msra.mxu0 0
    %432 = vmatprep.subr.bf16.mxu0 0
    %433 = vmatpush1.bf16.msra.mxu0 0
    %434 = vmatprep.mubr.bf16.mxu0 0
    %435 = vmatmul.mubr.bf16.gmra.mrb[0].mxu0 %v397
    %v436 = vpop.f32.mrb[0].mxu0
    %v437 = vadd.f32 %v372, %v436
    %v438 = vpop.f32.mrb[0].mxu0
    %v439 = vpop.f32.mrb[0].mxu0
    %v440 = vadd.f32 %v376, %v439
    %v441 = vpop.f32.mrb[0].mxu0
    %442 = vmatprep.mubr.bf16.mxu0 0
    %443 = vmatmul.mubr.bf16.gmra.mrb[0].mxu0 %v400
    %v444 = vpop.f32.mrb[0].mxu0
    %v445 = vadd.f32 %v380, %v444
    %v446 = vpop.f32.mrb[0].mxu0
    %v447 = vpop.f32.mrb[0].mxu0
    %v448 = vadd.f32 %v384, %v447
    %v449 = vpop.f32.mrb[0].mxu0
    %450 = vdwg.mxu0
    %vm451 = vcmp.gt.f32.partialorder %v437, 20.0
    %vm452 = vcmp.gt.f32.partialorder %v440, 20.0
    %vm453 = vcmp.gt.f32.partialorder %v445, 20.0
    %vm454 = vcmp.gt.f32.partialorder %v448, 20.0
    %v455 = vmin.f32 %v437, 20.0
    %v456 = vmin.f32 %v440, 20.0
    %v457 = vmin.f32 %v445, 20.0
    %v458 = vmin.f32 %v448, 20.0
    %v459 = vmul.f32 %v455, 1.442695
    %v460 = vpow.pop %v459
    %v461 = vmul.f32 %v456, 1.442695
    %v462 = vpow.pop %v461
    %v463 = vmul.f32 %v457, 1.442695
    %v464 = vpow.pop %v463
    %v465 = vmul.f32 %v458, 1.442695
    %v466 = vpow.pop %v465
    %v467 = vadd.f32 %v460, 1.0
    %v468 = vlog2.pop %v467
    %v469 = vmul.f32 %v468, 0.6931472
    %v470 = vmul.f32 -0.5, %v460
    %v471 = vadd.f32 %v470, 1.0
    %v472 = vmul.f32 %v471, %v460
    %v473 = vand.u32 2147483647, %v460
    %vm474 = vcmp.lt.f32.partialorder %v473, 0.0004427343
    %v475 = vsel %vm474, %v472, %v469
    %v476 = vadd.f32 %v462, 1.0
    %v477 = vlog2.pop %v476
    %v478 = vmul.f32 %v477, 0.6931472
    %v479 = vmul.f32 -0.5, %v462
    %v480 = vadd.f32 %v479, 1.0
    %v481 = vmul.f32 %v480, %v462
    %v482 = vand.u32 2147483647, %v462
    %vm483 = vcmp.lt.f32.partialorder %v482, 0.0004427343
    %v484 = vsel %vm483, %v481, %v478
    %v485 = vadd.f32 %v464, 1.0
    %v486 = vlog2.pop %v485
    %v487 = vmul.f32 %v486, 0.6931472
    %v488 = vmul.f32 -0.5, %v464
    %v489 = vadd.f32 %v488, 1.0
    %v490 = vmul.f32 %v489, %v464
    %v491 = vand.u32 2147483647, %v464
    %vm492 = vcmp.lt.f32.partialorder %v491, 0.0004427343
    %v493 = vsel %vm492, %v490, %v487
    %v494 = vadd.f32 %v466, 1.0
    %v495 = vlog2.pop %v494
    %v496 = vmul.f32 %v495, 0.6931472
    %v497 = vmul.f32 -0.5, %v466
    %v498 = vadd.f32 %v497, 1.0
    %v499 = vmul.f32 %v498, %v466
    %v500 = vand.u32 2147483647, %v466
    %vm501 = vcmp.lt.f32.partialorder %v500, 0.0004427343
    %v502 = vsel %vm501, %v499, %v496
    %v503 = vsel %vm451, %v437, %v475
    %v504 = vsel %vm452, %v440, %v484
    %v505 = vsel %vm453, %v445, %v493
    %v506 = vsel %vm454, %v448, %v502
    %507 = vset.pattern.permute.xlu0 7
    %508 = vperm.xlu0 %507, %v17
    %v509 = vpop.permute.xlu0 %508
    %511 = vset.pattern.permute.xlu0 7
    %512 = vperm.xlu0 %511, %v18
    %v513 = vpop.permute.xlu0 %512
    %515 = vset.pattern.permute.xlu0 7
    %516 = vperm.xlu0 %515, %v19
    %v517 = vpop.permute.xlu0 %516
    %519 = vset.pattern.permute.xlu0 7
    %520 = vperm.xlu0 %519, %v20
    %v521 = vpop.permute.xlu0 %520
    %v523 = vmul.f32 %v509, %v503
    %v524 = vmul.f32 %v513, %v504
    %v525 = vmul.f32 %v517, %v505
    %v526 = vmul.f32 %v521, %v506
    %v527 = vadd.f32 %v523, %v524
    %v528 = vadd.f32 %v527, %v525
    %v529 = vadd.f32 %v528, %v526
    %v530 = vrot.slane %v529, 4
    %v531 = vadd.f32 %v529, %v530
    %v532 = vrot.slane %v531, 2
    %v533 = vadd.f32 %v531, %v532
    %v534 = vrot.slane %v533, 1
    %v535 = vadd.f32 %v533, %v534
    %536 = vset.pattern.permute.xlu0 8
    %537 = vperm.xlu0 %536, %v17
    %v538 = vpop.permute.xlu0 %537
    %540 = vset.pattern.permute.xlu0 8
    %541 = vperm.xlu0 %540, %v18
    %v542 = vpop.permute.xlu0 %541
    %544 = vset.pattern.permute.xlu0 8
    %545 = vperm.xlu0 %544, %v19
    %v546 = vpop.permute.xlu0 %545
    %548 = vset.pattern.permute.xlu0 8
    %549 = vperm.xlu0 %548, %v20
    %v550 = vpop.permute.xlu0 %549
    %v552 = vmul.f32 %v538, %v503
    %v553 = vmul.f32 %v542, %v504
    %v554 = vmul.f32 %v546, %v505
    %v555 = vmul.f32 %v550, %v506
    %v556 = vadd.f32 %v552, %v553
    %v557 = vadd.f32 %v556, %v554
    %v558 = vadd.f32 %v557, %v555
    %v559 = vrot.slane %v558, 4
    %v560 = vadd.f32 %v558, %v559
    %v561 = vrot.slane %v560, 2
    %v562 = vadd.f32 %v560, %v561
    %v563 = vrot.slane %v562, 1
    %v564 = vadd.f32 %v562, %v563
    %565 = vset.pattern.permute.xlu0 11
    %566 = vperm.xlu0 %565, %v17
    %v567 = vpop.permute.xlu0 %566
    %v569 = vadd.f32 %v535, %v567
    %570 = vst [vmem:[#allocation2] sm:$0x1] %v569
    %v571 = vadd.f32 %v564, %v567
    %572 = vst [vmem:[#allocation2] sm:$0x2] %v571
    // Predicated region
    $region14: #{tpu_custom_call.1} parent=1 // pred_check
      _
    $region15: #{tpu_custom_call.1} parent=1 // pred_check_branch
      %574 = sbr.rel (0) target = $region17
    $region16: #{tpu_custom_call.1} parent=1 // pred_region
      %s576 = ssub.s32 32, 32
      %577 = vsyncadd [#allocation3], %s576
      %s579 = sshll.u32 [#allocation2], 4
      %s580 = int_to_ptr.vmem [resolvable:$true] %s579
      %582 = dma.vmem_to_hbm [thread:$0]  %s580, 32, %s3, [#allocation3]
    $region17: #{tpu_custom_call.1} parent=1 // pred_fallthru
      _
    // Predicated region
    $region18: #{tpu_custom_call.1} parent=1 // pred_check
      _
    $region19: #{tpu_custom_call.1} parent=1 // pred_check_branch
      %584 = sbr.rel (0) target = $region21
    $region20: #{tpu_custom_call.1} parent=1 // pred_region
      %585 = dma.done [#allocation3], 32
    $region21: #{tpu_custom_call.1} parent=1 // pred_fallthru
      _
    %586 = vsyncpa [#allocation3], 1

</llo_original>
